<compile_context>
chip_gen: v5e
topology: v5e:2x2
jax: 0.10.0
libtpu: 0.0.40
codegen_flags: <defaults>
</compile_context>

<pallas_src>
import functools

import jax
import jax.numpy as jnp
from jax.experimental import pallas as pl
from jax.experimental.pallas import tpu as pltpu

H1 = 128      # first hidden width
H2 = 64       # second hidden width
OUT = 2       # logits
OUT_PAD = 128  # lane-dense padded output width


def mlp_kernel(x_ref, w1_ref, b1_ref, w2_ref, b2_ref, w3_ref, b3_ref, o_ref):
    # Layer 1: (TB, D)bf16 @ (D, 128)bf16 -> f32 accumulate; bias+ReLU in f32.
    h1 = jnp.dot(x_ref[...], w1_ref[...], preferred_element_type=jnp.float32)
    h1 = jnp.maximum(h1 + b1_ref[...], 0.0)
    # Dropout(0.2): identity in eval mode.

    # Layer 2: (TB, 128)bf16 @ (128, 64)bf16 -> f32; bias+ReLU in f32.
    h2 = jnp.dot(h1.astype(jnp.bfloat16), w2_ref[...],
                 preferred_element_type=jnp.float32)
    h2 = jnp.maximum(h2 + b2_ref[...], 0.0)
    # Dropout(0.2): identity in eval mode.

    # Layer 3: (TB, 64)bf16 @ (64, 128)bf16 -> f32.  w3/b3 are zero-padded
    # from 2 to 128 output columns so the store is lane-dense (unmasked vst).
    out = jnp.dot(h2.astype(jnp.bfloat16), w3_ref[...],
                  preferred_element_type=jnp.float32)
    o_ref[...] = (out + b3_ref[...]).astype(o_ref.dtype)


def prepare_params(params):
    """Cast matmul weights to bf16 (kernel accumulates in f32), keep biases in
    f32, and zero-pad the final projection to OUT_PAD lane-dense columns."""
    w3p = jnp.zeros((H2, OUT_PAD), jnp.float32).at[:, :OUT].set(params["w3"])
    b3p = jnp.zeros((1, OUT_PAD), jnp.float32).at[:, :OUT].set(params["b3"])
    return dict(
        w1=params["w1"].astype(jnp.bfloat16),
        b1=params["b1"].astype(jnp.float32),
        w2=params["w2"].astype(jnp.bfloat16),
        b2=params["b2"].astype(jnp.float32),
        w3=w3p.astype(jnp.bfloat16),
        b3=b3p,
    )


@functools.partial(jax.jit, static_argnames=("block_batch",))
def mlmodel_forward(x, kparams, *, block_batch=256):
    """x: (batch, input_size) f32. kparams: output of prepare_params."""
    batch, in_dim = x.shape
    w1, b1 = kparams["w1"], kparams["b1"]
    w2, b2 = kparams["w2"], kparams["b2"]
    w3, b3 = kparams["w3"], kparams["b3"]

    # Batch tile: multiple of 8 (f32 sublane), capped at block_batch; pad the
    # batch so the grid divides evenly.  Padded rows are sliced off at the end.
    tb = min(block_batch, max(8, -(-batch // 8) * 8))
    padded = -(-batch // tb) * tb

    xb = x.astype(jnp.bfloat16)
    if padded != batch:
        xb = jnp.pad(xb, ((0, padded - batch), (0, 0)))

    grid = (padded // tb,)

    def const_spec(a):
        return pl.BlockSpec(a.shape, lambda i: (0,) * a.ndim)

    flops = 2 * padded * (in_dim * H1 + H1 * H2 + H2 * OUT_PAD)
    bytes_accessed = (
        padded * in_dim * 2 + padded * OUT_PAD * 4      # x in, out
        + (w1.size + w2.size + w3.size) * 2             # bf16 weights
        + (b1.size + b2.size + b3.size) * 4             # f32 biases
    )

    out_padded = pl.pallas_call(
        mlp_kernel,
        out_shape=jax.ShapeDtypeStruct((padded, OUT_PAD), jnp.float32),
        grid=grid,
        in_specs=[
            pl.BlockSpec((tb, in_dim), lambda i: (i, 0)),
            const_spec(w1), const_spec(b1),
            const_spec(w2), const_spec(b2),
            const_spec(w3), const_spec(b3),
        ],
        out_specs=pl.BlockSpec((tb, OUT_PAD), lambda i: (i, 0)),
        compiler_params=pltpu.CompilerParams(
            dimension_semantics=("parallel",),
            vmem_limit_bytes=32 * 1024 * 1024,
        ),
        cost_estimate=pl.CostEstimate(
            flops=flops, transcendentals=0, bytes_accessed=bytes_accessed),
    )(xb, w1, b1, w2, b2, w3, b3)

    return out_padded[:batch, :OUT]


def init_params(key, input_size):
    """Deterministic init mimicking PyTorch Linear (uniform +/- 1/sqrt(fan_in)).
    Weights stored as (in_features, out_features) so y = x @ W + b."""
    dims = [(input_size, H1), (H1, H2), (H2, OUT)]
    params = {}
    for i, (fan_in, fan_out) in enumerate(dims, start=1):
        key, kw, kb = jax.random.split(key, 3)
        bound = 1.0 / (fan_in ** 0.5)
        params[f"w{i}"] = jax.random.uniform(
            kw, (fan_in, fan_out), jnp.float32, minval=-bound, maxval=bound)
        params[f"b{i}"] = jax.random.uniform(
            kb, (1, fan_out), jnp.float32, minval=-bound, maxval=bound)
    return params


if __name__ == "__main__":
    key = jax.random.PRNGKey(0)
    input_size = 32
    batch = 8

    kx, kp = jax.random.split(key)
    x = jax.random.normal(kx, (batch, input_size), jnp.float32)
    params = init_params(kp, input_size)
    kparams = prepare_params(params)

    out = mlmodel_forward(x, kparams)
    jax.block_until_ready(out)

    # Reference in plain f32 JAX (same math as the PyTorch module in eval mode).
    h1 = jnp.maximum(x @ params["w1"] + params["b1"], 0.0)
    h2 = jnp.maximum(h1 @ params["w2"] + params["b2"], 0.0)
    ref = h2 @ params["w3"] + params["b3"]

    assert out.shape == (batch, OUT)
    # bf16 matmul inputs with f32 accumulation -> loosened tolerance vs f32 ref.
    assert jnp.allclose(out, ref, atol=5e-2, rtol=5e-2), (
        f"max abs err {jnp.max(jnp.abs(out - ref))}")

    print("KERNEL_OK")
</pallas_src>

<mosaic_0001>
module attributes {stable_mosaic.version = 11 : i64} {
  func.func @mlp_kernel(%arg0: i32, %arg1: memref<8x32xbf16, #tpu.memory_space<vmem>>, %arg2: memref<32x128xbf16, #tpu.memory_space<vmem>>, %arg3: memref<1x128xf32, #tpu.memory_space<vmem>>, %arg4: memref<128x64xbf16, #tpu.memory_space<vmem>>, %arg5: memref<1x64xf32, #tpu.memory_space<vmem>>, %arg6: memref<64x128xbf16, #tpu.memory_space<vmem>>, %arg7: memref<1x128xf32, #tpu.memory_space<vmem>>, %arg8: memref<8x128xf32, #tpu.memory_space<vmem>>) attributes {dimension_semantics = [#tpu.dimension_semantics<parallel>], iteration_bounds = array<i64: 1>, scalar_prefetch = 0 : i64, scratch_operands = 0 : i64, tpu.core_type = #tpu.core_type<tc>, window_params = [{transform_indices = @transform_0, window_bounds = array<i64: 8, 32>}, {pipeline_mode = #tpu.pipeline_mode<synchronous>, transform_indices = @transform_1, window_bounds = array<i64: 32, 128>}, {pipeline_mode = #tpu.pipeline_mode<synchronous>, transform_indices = @transform_2, window_bounds = array<i64: 1, 128>}, {pipeline_mode = #tpu.pipeline_mode<synchronous>, transform_indices = @transform_3, window_bounds = array<i64: 128, 64>}, {pipeline_mode = #tpu.pipeline_mode<synchronous>, transform_indices = @transform_4, window_bounds = array<i64: 1, 64>}, {pipeline_mode = #tpu.pipeline_mode<synchronous>, transform_indices = @transform_5, window_bounds = array<i64: 64, 128>}, {pipeline_mode = #tpu.pipeline_mode<synchronous>, transform_indices = @transform_6, window_bounds = array<i64: 1, 128>}, {transform_indices = @transform_7, window_bounds = array<i64: 8, 128>}]} {
    %c0 = arith.constant 0 : index
    %c0_0 = arith.constant 0 : index
    %0 = vector.load %arg1[%c0, %c0_0] : memref<8x32xbf16, #tpu.memory_space<vmem>>, vector<8x32xbf16>
    %c0_1 = arith.constant 0 : index
    %c0_2 = arith.constant 0 : index
    %1 = vector.load %arg2[%c0_1, %c0_2] : memref<32x128xbf16, #tpu.memory_space<vmem>>, vector<32x128xbf16>
    %cst = arith.constant dense<0.000000e+00> : vector<8x128xf32>
    %2 = tpu.matmul %0, %1, %cst {dimension_numbers = #tpu.dot_dimension_numbers<[1], [0], [0], [1], [0, 0, 1, 1], [], []>} : vector<8x32xbf16>, vector<32x128xbf16>, vector<8x128xf32> -> vector<8x128xf32>
    %c0_3 = arith.constant 0 : index
    %c0_4 = arith.constant 0 : index
    %3 = vector.load %arg3[%c0_3, %c0_4] : memref<1x128xf32, #tpu.memory_space<vmem>>, vector<1x128xf32>
    %4 = vector.broadcast %3 : vector<1x128xf32> to vector<8x128xf32>
    %5 = arith.addf %2, %4 : vector<8x128xf32>
    %cst_5 = arith.constant 0.000000e+00 : f32
    %6 = vector.broadcast %cst_5 : f32 to vector<8x128xf32>
    %7 = arith.maximumf %5, %6 : vector<8x128xf32>
    %8 = arith.truncf %7 : vector<8x128xf32> to vector<8x128xbf16>
    %c0_6 = arith.constant 0 : index
    %c0_7 = arith.constant 0 : index
    %9 = vector.load %arg4[%c0_6, %c0_7] : memref<128x64xbf16, #tpu.memory_space<vmem>>, vector<128x64xbf16>
    %cst_8 = arith.constant dense<0.000000e+00> : vector<8x64xf32>
    %10 = tpu.matmul %8, %9, %cst_8 {dimension_numbers = #tpu.dot_dimension_numbers<[1], [0], [0], [1], [0, 0, 1, 1], [], []>} : vector<8x128xbf16>, vector<128x64xbf16>, vector<8x64xf32> -> vector<8x64xf32>
    %c0_9 = arith.constant 0 : index
    %c0_10 = arith.constant 0 : index
    %11 = vector.load %arg5[%c0_9, %c0_10] : memref<1x64xf32, #tpu.memory_space<vmem>>, vector<1x64xf32>
    %12 = vector.broadcast %11 : vector<1x64xf32> to vector<8x64xf32>
    %13 = arith.addf %10, %12 : vector<8x64xf32>
    %cst_11 = arith.constant 0.000000e+00 : f32
    %14 = vector.broadcast %cst_11 : f32 to vector<8x64xf32>
    %15 = arith.maximumf %13, %14 : vector<8x64xf32>
    %16 = arith.truncf %15 : vector<8x64xf32> to vector<8x64xbf16>
    %c0_12 = arith.constant 0 : index
    %c0_13 = arith.constant 0 : index
    %17 = vector.load %arg6[%c0_12, %c0_13] : memref<64x128xbf16, #tpu.memory_space<vmem>>, vector<64x128xbf16>
    %cst_14 = arith.constant dense<0.000000e+00> : vector<8x128xf32>
    %18 = tpu.matmul %16, %17, %cst_14 {dimension_numbers = #tpu.dot_dimension_numbers<[1], [0], [0], [1], [0, 0, 1, 1], [], []>} : vector<8x64xbf16>, vector<64x128xbf16>, vector<8x128xf32> -> vector<8x128xf32>
    %c0_15 = arith.constant 0 : index
    %c0_16 = arith.constant 0 : index
    %19 = vector.load %arg7[%c0_15, %c0_16] : memref<1x128xf32, #tpu.memory_space<vmem>>, vector<1x128xf32>
    %20 = vector.broadcast %19 : vector<1x128xf32> to vector<8x128xf32>
    %21 = arith.addf %18, %20 : vector<8x128xf32>
    %c0_17 = arith.constant 0 : index
    %c0_18 = arith.constant 0 : index
    %22 = vector.load %arg8[%c0_17, %c0_18] : memref<8x128xf32, #tpu.memory_space<vmem>>, vector<8x128xf32>
    tpu.vector_store %arg8[%c0_17, %c0_18], %21 {strides = array<i32>} : memref<8x128xf32, #tpu.memory_space<vmem>>, vector<8x128xf32>,
    return
  }
  func.func @transform_0(%arg0: i32) -> (i32, i32) {
    %c0_i32 = arith.constant 0 : i32
    %c0_i32_0 = arith.constant 0 : i32
    return %arg0, %c0_i32 : i32, i32
  }
  func.func @transform_1(%arg0: i32) -> (i32, i32) {
    %c0_i32 = arith.constant 0 : i32
    %c0_i32_0 = arith.constant 0 : i32
    %c0_i32_1 = arith.constant 0 : i32
    return %c0_i32, %c0_i32_0 : i32, i32
  }
  func.func @transform_2(%arg0: i32) -> (i32, i32) {
    %c0_i32 = arith.constant 0 : i32
    %c0_i32_0 = arith.constant 0 : i32
    %c0_i32_1 = arith.constant 0 : i32
    return %c0_i32, %c0_i32_0 : i32, i32
  }
  func.func @transform_3(%arg0: i32) -> (i32, i32) {
    %c0_i32 = arith.constant 0 : i32
    %c0_i32_0 = arith.constant 0 : i32
    %c0_i32_1 = arith.constant 0 : i32
    return %c0_i32, %c0_i32_0 : i32, i32
  }
  func.func @transform_4(%arg0: i32) -> (i32, i32) {
    %c0_i32 = arith.constant 0 : i32
    %c0_i32_0 = arith.constant 0 : i32
    %c0_i32_1 = arith.constant 0 : i32
    return %c0_i32, %c0_i32_0 : i32, i32
  }
  func.func @transform_5(%arg0: i32) -> (i32, i32) {
    %c0_i32 = arith.constant 0 : i32
    %c0_i32_0 = arith.constant 0 : i32
    %c0_i32_1 = arith.constant 0 : i32
    return %c0_i32, %c0_i32_0 : i32, i32
  }
  func.func @transform_6(%arg0: i32) -> (i32, i32) {
    %c0_i32 = arith.constant 0 : i32
    %c0_i32_0 = arith.constant 0 : i32
    %c0_i32_1 = arith.constant 0 : i32
    return %c0_i32, %c0_i32_0 : i32, i32
  }
  func.func @transform_7(%arg0: i32) -> (i32, i32) {
    %c0_i32 = arith.constant 0 : i32
    %c0_i32_0 = arith.constant 0 : i32
    return %arg0, %c0_i32 : i32, i32
  }
}

</mosaic_0001>

<llo_original>
// kernel: mlmodel_forward.1
$region0: #{mlmodel_forward.1}
  #allocation0 [shape = 'u32[]', space=smem, size = 0x4, offset = 0x4, fixed_abs, tag = 'smem constant byte address 0x4 - core index']
  #allocation1 [shape = 'u32[72,128]{1,0:T(1,128)}', space=vmem, size = 0x9000, scoped, tag = 'internal scratch']
  %s0 = inlined_call_operand.vmem [shape: bf16[8,32], index: 0, kind: input, shape index: {}]
  %s1 = inlined_call_operand.vmem [shape: bf16[32,128], index: 1, kind: input, shape index: {}]
  %s2 = inlined_call_operand.vmem [shape: f32[1,128], index: 2, kind: input, shape index: {}]
  %s3 = inlined_call_operand.vmem [shape: bf16[128,64], index: 3, kind: input, shape index: {}]
  %s4 = inlined_call_operand.vmem [shape: f32[1,64], index: 4, kind: input, shape index: {}]
  %s5 = inlined_call_operand.vmem [shape: bf16[64,128], index: 5, kind: input, shape index: {}]
  %s6 = inlined_call_operand.vmem [shape: f32[1,128], index: 6, kind: input, shape index: {}]
  %s7 = inlined_call_operand.vmem [shape: f32[8,128], index: 7, kind: output, shape index: {}]
  %s8 = sld [smem:[#allocation0]]
  $region38: #{mlmodel_forward.1} parent=0
    _
  %s10 = ssub.s32 1, %s8
  %s11 = scalar_select 0, %s10, %s8
  // Predicated region
  $region2: #{mlmodel_forward.1} parent=0 // pred_check
    _
  $region3: #{mlmodel_forward.1} parent=0 // pred_check_branch
    %13 = sbr.rel (0) target = $region5
  $region4: #{mlmodel_forward.1} parent=0 // pred_region
    _
  $region5: #{mlmodel_forward.1} parent=0 // pred_fallthru
    _
  // Predicated region
  $region6: #{mlmodel_forward.1} parent=0 // pred_check
    _
  $region7: #{mlmodel_forward.1} parent=0 // pred_check_branch
    %15 = sbr.rel (0) target = $region9
  $region8: #{mlmodel_forward.1} parent=0 // pred_region
    _
  $region9: #{mlmodel_forward.1} parent=0 // pred_fallthru
    _
  // Predicated region
  $region10: #{mlmodel_forward.1} parent=0 // pred_check
    _
  $region11: #{mlmodel_forward.1} parent=0 // pred_check_branch
    %17 = sbr.rel (0) target = $region13
  $region12: #{mlmodel_forward.1} parent=0 // pred_region
    _
  $region13: #{mlmodel_forward.1} parent=0 // pred_fallthru
    _
  // Predicated region
  $region14: #{mlmodel_forward.1} parent=0 // pred_check
    _
  $region15: #{mlmodel_forward.1} parent=0 // pred_check_branch
    %19 = sbr.rel (0) target = $region17
  $region16: #{mlmodel_forward.1} parent=0 // pred_region
    _
  $region17: #{mlmodel_forward.1} parent=0 // pred_fallthru
    _
  // Predicated region
  $region18: #{mlmodel_forward.1} parent=0 // pred_check
    _
  $region19: #{mlmodel_forward.1} parent=0 // pred_check_branch
    %21 = sbr.rel (0) target = $region21
  $region20: #{mlmodel_forward.1} parent=0 // pred_region
    _
  $region21: #{mlmodel_forward.1} parent=0 // pred_fallthru
    _
  // Predicated region
  $region22: #{mlmodel_forward.1} parent=0 // pred_check
    _
  $region23: #{mlmodel_forward.1} parent=0 // pred_check_branch
    %23 = sbr.rel (0) target = $region25
  $region24: #{mlmodel_forward.1} parent=0 // pred_region
    _
  $region25: #{mlmodel_forward.1} parent=0 // pred_fallthru
    _
  // Predicated region
  $region26: #{mlmodel_forward.1} parent=0 // pred_check
    _
  $region27: #{mlmodel_forward.1} parent=0 // pred_check_branch
    %25 = sbr.rel (0) target = $region29
  $region28: #{mlmodel_forward.1} parent=0 // pred_region
    _
  $region29: #{mlmodel_forward.1} parent=0 // pred_fallthru
    _
  %v27 = vld [vmem:[%s0] sm:$0xf]
  %v28 = vld [vmem:[%s1] sm:$0xf]
  %v29 = vld [vmem:[%s1 + $0x4] sm:$0xf]
  %v30 = vld [vmem:[%s1 + $0x8] sm:$0xf]
  %v31 = vld [vmem:[%s1 + $0xc] sm:$0xf]
  %v32 = vld [vmem:[%s2] sm:$0x1]
  %v34 = vperm.slane %v32, 0
  %v40 = vunpack.c.l.b16 %v28
  %v41 = vunpack.c.l.b16 %v29
  %v42 = vunpack.c.l.b16 %v30
  %v43 = vunpack.c.l.b16 %v31
  %v44 = vpack.c.b16 %v41, %v40
  %v45 = vpack.c.b16 %v43, %v42
  %vm48 = vcmask 261120
  %v50 = vsel %vm48, %v27, 0
  %52 = vmatpush.bf16.msra.mxu0 0
  %53 = vmatpush.bf16.msra.mxu0 0
  %54 = vmatpush.bf16.msra.mxu0 0
  %55 = vmatpush.bf16.msra.mxu0 0
  %56 = vmatpush.bf16.msra.mxu0 0
  %57 = vmatpush.bf16.msra.mxu0 0
  %58 = vmatpush.bf16.msra.mxu0 %v45
  %59 = vmatpush.bf16.msra.mxu0 %v44
  %60 = vmatmul.bf16.gmra.mxu0 %v50
  %v61 = vpop.f32.mrf.mxu0
  %v62 = vadd.f32 %v34, %v61
  %v63 = vpop.f32.mrf.mxu0
  %64 = vdwg.mxu0
  %v65 = vmax.f32 %v62, 0.0
  %v66 = vpack.c.bf16 %v65, %v65
  %v67 = vld [vmem:[%s3] sm:$0xf]
  %v68 = vld [vmem:[%s3 + $0x4] sm:$0xf]
  %v69 = vld [vmem:[%s3 + $0x8] sm:$0xf]
  %v70 = vld [vmem:[%s3 + $0xc] sm:$0xf]
  %v71 = vld [vmem:[%s3 + $0x10] sm:$0xf]
  %v72 = vld [vmem:[%s3 + $0x14] sm:$0xf]
  %v73 = vld [vmem:[%s3 + $0x18] sm:$0xf]
  %v74 = vld [vmem:[%s3 + $0x1c] sm:$0xf]
  %v75 = vld [vmem:[%s3 + $0x20] sm:$0xf]
  %v76 = vld [vmem:[%s3 + $0x24] sm:$0xf]
  %v77 = vld [vmem:[%s3 + $0x28] sm:$0xf]
  %v78 = vld [vmem:[%s3 + $0x2c] sm:$0xf]
  %v79 = vld [vmem:[%s3 + $0x30] sm:$0xf]
  %v80 = vld [vmem:[%s3 + $0x34] sm:$0xf]
  %v81 = vld [vmem:[%s3 + $0x38] sm:$0xf]
  %v82 = vld [vmem:[%s3 + $0x3c] sm:$0xf]
  %v83 = vld [vmem:[%s4] sm:$0x1]
  %v85 = vperm.slane %v83, 0
  %v103 = vunpack.c.l.b16 %v67
  %v104 = vunpack.c.l.b16 %v68
  %v105 = vunpack.c.l.b16 %v69
  %v106 = vunpack.c.l.b16 %v70
  %v107 = vunpack.c.l.b16 %v71
  %v108 = vunpack.c.l.b16 %v72
  %v109 = vunpack.c.l.b16 %v73
  %v110 = vunpack.c.l.b16 %v74
  %v111 = vunpack.c.l.b16 %v75
  %v112 = vunpack.c.l.b16 %v76
  %v113 = vunpack.c.l.b16 %v77
  %v114 = vunpack.c.l.b16 %v78
  %v115 = vunpack.c.l.b16 %v79
  %v116 = vunpack.c.l.b16 %v80
  %v117 = vunpack.c.l.b16 %v81
  %v118 = vunpack.c.l.b16 %v82
  %v119 = vpack.c.b16 %v104, %v103
  %v120 = vpack.c.b16 %v106, %v105
  %v121 = vpack.c.b16 %v108, %v107
  %v122 = vpack.c.b16 %v110, %v109
  %v123 = vpack.c.b16 %v112, %v111
  %v124 = vpack.c.b16 %v114, %v113
  %v125 = vpack.c.b16 %v116, %v115
  %v126 = vpack.c.b16 %v118, %v117
  %135 = vmatpush.bf16.msra.mxu0 %v126
  %136 = vmatpush.bf16.msra.mxu0 %v125
  %137 = vmatpush.bf16.msra.mxu0 %v124
  %138 = vmatpush.bf16.msra.mxu0 %v123
  %139 = vmatpush.bf16.msra.mxu0 %v122
  %140 = vmatpush.bf16.msra.mxu0 %v121
  %141 = vmatpush.bf16.msra.mxu0 %v120
  %142 = vmatpush.bf16.msra.mxu0 %v119
  %143 = vmatmul.bf16.gmra.mxu0 %v66
  %v144 = vpop.f32.mrf.mxu0
  %v145 = vadd.f32 %v85, %v144
  %v146 = vpop.f32.mrf.mxu0
  %147 = vdwg.mxu0
  %v148 = vmax.f32 %v145, 0.0
  %v149 = vpack.c.bf16 %v148, %v148
  %v150 = vld [vmem:[%s5] sm:$0xf]
  %v151 = vld [vmem:[%s5 + $0x4] sm:$0xf]
  %v152 = vld [vmem:[%s5 + $0x8] sm:$0xf]
  %v153 = vld [vmem:[%s5 + $0xc] sm:$0xf]
  %v154 = vld [vmem:[%s5 + $0x10] sm:$0xf]
  %v155 = vld [vmem:[%s5 + $0x14] sm:$0xf]
  %v156 = vld [vmem:[%s5 + $0x18] sm:$0xf]
  %v157 = vld [vmem:[%s5 + $0x1c] sm:$0xf]
  %v158 = vld [vmem:[%s6] sm:$0x1]
  %v160 = vperm.slane %v158, 0
  %v170 = vunpack.c.l.b16 %v150
  %v171 = vunpack.c.l.b16 %v151
  %v172 = vunpack.c.l.b16 %v152
  %v173 = vunpack.c.l.b16 %v153
  %v174 = vunpack.c.l.b16 %v154
  %v175 = vunpack.c.l.b16 %v155
  %v176 = vunpack.c.l.b16 %v156
  %v177 = vunpack.c.l.b16 %v157
  %v178 = vpack.c.b16 %v171, %v170
  %v179 = vpack.c.b16 %v173, %v172
  %v180 = vpack.c.b16 %v175, %v174
  %v181 = vpack.c.b16 %v177, %v176
  %vm186 = vcmask 523264
  %v188 = vsel %vm186, %v149, 0
  %190 = vmatpush.bf16.msra.mxu0 0
  %191 = vmatpush.bf16.msra.mxu0 0
  %192 = vmatpush.bf16.msra.mxu0 0
  %193 = vmatpush.bf16.msra.mxu0 0
  %194 = vmatpush.bf16.msra.mxu0 %v181
  %195 = vmatpush.bf16.msra.mxu0 %v180
  %196 = vmatpush.bf16.msra.mxu0 %v179
  %197 = vmatpush.bf16.msra.mxu0 %v178
  %198 = vmatmul.bf16.gmra.mxu0 %v188
  %v199 = vpop.f32.mrf.mxu0
  %v200 = vadd.f32 %v160, %v199
  %v201 = vpop.f32.mrf.mxu0
  %202 = vdwg.mxu0
  %203 = vst [vmem:[%s7] sm:$0xff] %v200
  // Predicated region
  $region30: #{mlmodel_forward.1} parent=0 // pred_check
    _
  $region31: #{mlmodel_forward.1} parent=0 // pred_check_branch
    %205 = sbr.rel (0) target = $region33
  $region32: #{mlmodel_forward.1} parent=0 // pred_region
    _
  $region33: #{mlmodel_forward.1} parent=0 // pred_fallthru
    _
  // Predicated region
  $region34: #{mlmodel_forward.1} parent=0 // pred_check
    _
  $region35: #{mlmodel_forward.1} parent=0 // pred_check_branch
    %207 = sbr.rel (0) target = $region37
  $region36: #{mlmodel_forward.1} parent=0 // pred_region
    _
  $region37: #{mlmodel_forward.1} parent=0 // pred_fallthru
    _

</llo_original>
